<compile_context>
chip_gen: v6e
topology: v6e:2x2x1
jax: 0.10.0
libtpu: 0.0.40
codegen_flags: <defaults>
</compile_context>

<pallas_src>
import functools
from typing import NamedTuple

import jax
import jax.numpy as jnp
from jax.experimental import pallas as pl
from jax.experimental.pallas import tpu as pltpu

EPS = 1e-5  # PyTorch nn.LayerNorm default eps


def _round_up(x, m):
    return ((x + m - 1) // m) * m


def _choose_block_m(n, target=512):
    """Batch tile: balanced tiles (bounded tail waste), >=2 tiles when possible."""
    if n <= 8:
        return 8
    n_tiles = max(-(-n // target), 2)       # >=2 grid steps -> both v7x TCs busy
    bm = -(-n // n_tiles)
    bm8 = _round_up(bm, 8)
    bm256 = _round_up(bm, 256)              # prefer full 256-wide MXU tiles when free
    if _round_up(n, bm256) <= _round_up(n, bm8):
        return bm256
    return bm8


def _vmem_capacity_bytes():
    try:
        return int(pltpu.get_tpu_info().vmem_capacity_bytes)
    except Exception:
        return 64 * 2**20  # conservative: v7x per-TC capacity


class PreparedParams(NamedTuple):
    """Padded / dtype-converted parameters.  Build once with prepare_params()."""
    w0: jax.Array   # (z_dim, h_pad)            weight dtype (bf16 by default)
    b0: jax.Array   # (1, h_pad)                f32
    wm: jax.Array   # (max(n_mid,1), h_pad, h_pad)
    bm: jax.Array   # (max(n_mid,1), 1, h_pad)  f32
    wv: jax.Array   # (h_pad, z_pad)
    bv: jax.Array   # (1, z_pad)                f32
    z_dim: int
    h_dim: int
    n_mid: int


def prepare_params(params, dot_dtype=jnp.bfloat16):
    """Pad weights to lane-dense shapes and cast to the MXU dtype — once."""
    w0, b0, wm, bm, wv, bv = params
    z_dim, h_dim = w0.shape
    n_mid = wm.shape[0]
    n_mid_p = max(n_mid, 1)
    h_pad = _round_up(h_dim, 128)
    z_pad = _round_up(z_dim, 128)
    wdtype = jnp.float32 if dot_dtype is None else dot_dtype

    w0p = jnp.pad(w0.astype(wdtype), ((0, 0), (0, h_pad - h_dim)))
    b0p = jnp.pad(b0.reshape(1, h_dim).astype(jnp.float32),
                  ((0, 0), (0, h_pad - h_dim)))
    wmp = jnp.pad(wm.astype(wdtype),
                  ((0, n_mid_p - n_mid), (0, h_pad - h_dim), (0, h_pad - h_dim)))
    bmp = jnp.pad(bm.reshape(n_mid, 1, h_dim).astype(jnp.float32),
                  ((0, n_mid_p - n_mid), (0, 0), (0, h_pad - h_dim)))
    wvp = jnp.pad(wv.astype(wdtype), ((0, h_pad - h_dim), (0, z_pad - z_dim)))
    bvp = jnp.pad(bv.reshape(1, z_dim).astype(jnp.float32),
                  ((0, 0), (0, z_pad - z_dim)))
    return PreparedParams(w0p, b0p, wmp, bmp, wvp, bvp, z_dim, h_dim, n_mid)


def vector_field_kernel(x_ref, w0_ref, b0_ref, wm_ref, bm_ref, wv_ref, bv_ref,
                        o_ref, h_ref, *, h_dim, n_mid):
    s = pl.program_id(1)
    h_pad = h_ref.shape[-1]

    if h_pad == h_dim:
        mask = None
    else:
        lane = jax.lax.broadcasted_iota(jnp.int32, (1, h_pad), 1)
        mask = (lane < h_dim).astype(jnp.float32)

    def dot(a, w):
        if w.dtype != a.dtype:
            a = a.astype(w.dtype)           # weights are pre-cast; only h is cast
        return jnp.dot(a, w, preferred_element_type=jnp.float32)

    def ln_relu(h):
        # LayerNorm (no affine) over the TRUE h_dim features, then ReLU.
        # Padded lanes of h are exactly zero -> unmasked sums are exact.
        inv_n = jnp.float32(1.0 / h_dim)
        mu = jnp.sum(h, axis=-1, keepdims=True) * inv_n
        ex2 = jnp.sum(h * h, axis=-1, keepdims=True) * inv_n
        var = ex2 - mu * mu
        out = jnp.maximum((h - mu) * jax.lax.rsqrt(var + EPS), 0.0)
        if mask is not None:
            out = out * mask                # keep padded lanes at exactly zero
        return out

    @pl.when(s == 0)                        # x2h: Linear -> LN -> ReLU
    def _():
        h_ref[...] = ln_relu(dot(x_ref[...], w0_ref[...]) + b0_ref[...])

    if n_mid > 0:                           # seq_nn: one LinearReLU per stage
        @pl.when(jnp.logical_and(s > 0, s < n_mid + 1))
        def _():
            h_ref[...] = ln_relu(dot(h_ref[...], wm_ref[0]) + bm_ref[0])

    @pl.when(s == n_mid + 1)                # h2v: plain Linear
    def _():
        v = dot(h_ref[...], wv_ref[...]) + bv_ref[...]
        o_ref[...] = v.astype(o_ref.dtype)


def vector_field(x, params, *, block_target=512):
    """VectorField.forward: x [N, z_dim] -> v [N, z_dim]."""
    if not isinstance(params, PreparedParams):
        params = prepare_params(params)     # hoist this out of hot loops!
    N, z_dim = x.shape
    assert z_dim == params.z_dim, (z_dim, params.z_dim)
    h_dim, n_mid = params.h_dim, params.n_mid
    h_pad = params.w0.shape[1]
    z_pad = params.wv.shape[1]
    n_mid_p = params.wm.shape[0]
    wbytes = params.w0.dtype.itemsize

    block_m = _choose_block_m(N, block_target)
    n_pad = _round_up(N, block_m)
    n_tiles = n_pad // block_m
    n_stages = n_mid + 2

    xp = x.astype(jnp.float32)
    if n_pad != N:
        xp = jnp.pad(xp, ((0, n_pad - N), (0, 0)))

    # Advisory cost estimate for the XLA scheduler.
    flops = 2 * n_pad * (z_dim * h_pad + n_mid * h_pad * h_pad + h_pad * z_pad)
    transcendentals = n_pad * (1 + n_mid)               # one rsqrt per row per LN
    bytes_accessed = (4 * n_pad * (z_dim + z_pad)                        # x + out
                      + n_tiles * n_mid_p * h_pad * h_pad * wbytes       # streamed wm
                      + (z_dim * h_pad + h_pad * z_pad) * wbytes         # w0 + wv
                      + 4 * (n_mid_p + 2) * (h_pad + z_pad))             # biases
    cost = pl.CostEstimate(flops=flops, transcendentals=transcendentals,
                           bytes_accessed=bytes_accessed)

    # VMEM residency estimate -> generation-clamped scoped-VMEM limit.
    est = (2 * h_pad * h_pad * wbytes                     # double-buffered wm layer
           + 2 * (z_dim * h_pad + h_pad * z_pad) * wbytes # w0 / wv buffers
           + 4 * 4 * (h_pad + z_pad)                      # biases
           + 2 * 4 * block_m * (z_dim + z_pad)            # x / out tiles
           + 4 * block_m * h_pad)                         # h scratch
    vmem_limit = int(min(max(1.5 * est + (8 << 20), 32 << 20),
                         0.9 * _vmem_capacity_bytes()))

    def wm_idx(i, s):
        # Stage 0 prefetches layer 0; the last stage reuses the final layer index
        # so no extra DMA happens outside the mid stages.
        return (jnp.clip(s - 1, 0, n_mid_p - 1), 0, 0)

    kernel = functools.partial(vector_field_kernel, h_dim=h_dim, n_mid=n_mid)

    out_pad = pl.pallas_call(
        kernel,
        out_shape=jax.ShapeDtypeStruct((n_pad, z_pad), x.dtype),
        grid=(n_tiles, n_stages),
        in_specs=[
            pl.BlockSpec((block_m, z_dim), lambda i, s: (i, 0)),     # x tile (true z)
            pl.BlockSpec((z_dim, h_pad), lambda i, s: (0, 0)),       # W0
            pl.BlockSpec((1, h_pad), lambda i, s: (0, 0)),           # b0
            pl.BlockSpec((1, h_pad, h_pad), wm_idx),                 # mid W (streamed)
            pl.BlockSpec((1, 1, h_pad), wm_idx),                     # mid b (streamed)
            pl.BlockSpec((h_pad, z_pad), lambda i, s: (0, 0)),       # Wv
            pl.BlockSpec((1, z_pad), lambda i, s: (0, 0)),           # bv
        ],
        out_specs=pl.BlockSpec((block_m, z_pad), lambda i, s: (i, 0)),
        scratch_shapes=[pltpu.VMEM((block_m, h_pad), jnp.float32)],  # carried h
        compiler_params=pltpu.CompilerParams(
            dimension_semantics=("parallel", "arbitrary"),
            vmem_limit_bytes=vmem_limit),
        cost_estimate=cost,
    )(xp, params.w0, params.b0, params.wm, params.bm, params.wv, params.bv)

    return out_pad[:N, :z_dim]


# ----------------------------------------------------------------------------
# Reference + init (pure JAX) for correctness checking.
# ----------------------------------------------------------------------------
def init_params(key, num_h_layers, z_dim, h_dim):
    """Deterministic init mimicking nn.Linear (uniform +/- 1/sqrt(fan_in)).

    Weights use (in, out) layout (transposed vs. PyTorch's (out, in))."""
    n_mid = num_h_layers - 1
    ks = jax.random.split(key, 6)

    def lin(kw, kb, fan_in, fan_out, extra=()):
        bound = 1.0 / jnp.sqrt(fan_in)
        w = jax.random.uniform(kw, extra + (fan_in, fan_out), jnp.float32,
                               -bound, bound)
        b = jax.random.uniform(kb, extra + (1, fan_out), jnp.float32,
                               -bound, bound)
        return w, b

    w0, b0 = lin(ks[0], ks[1], z_dim, h_dim)
    wm, bm = lin(ks[2], ks[3], h_dim, h_dim, extra=(n_mid,))
    wv, bv = lin(ks[4], ks[5], h_dim, z_dim)
    return w0, b0, wm, bm, wv, bv


def _ln_relu_ref(h):
    mu = jnp.mean(h, axis=-1, keepdims=True)
    var = jnp.mean((h - mu) ** 2, axis=-1, keepdims=True)
    return jnp.maximum((h - mu) * jax.lax.rsqrt(var + EPS), 0.0)


def vector_field_ref(x, params):
    w0, b0, wm, bm, wv, bv = params
    dot = functools.partial(jnp.dot, precision="highest")
    h = _ln_relu_ref(dot(x, w0) + b0)
    for i in range(wm.shape[0]):
        h = _ln_relu_ref(dot(h, wm[i]) + bm[i])
    return dot(h, wv) + bv


if __name__ == "__main__":
    num_h_layers, z_dim, h_dim = 3, 8, 32
    batch = 16

    key = jax.random.PRNGKey(0)
    kx, kp = jax.random.split(key)
    x = jax.random.normal(kx, (batch, z_dim), jnp.float32)
    params = init_params(kp, num_h_layers, z_dim, h_dim)
    ref = vector_field_ref(x, params)

    # Exact-math path (f32 weights / f32 MXU) -- tight check of the semantics.
    out_f32 = jax.block_until_ready(
        vector_field(x, prepare_params(params, dot_dtype=None)))
    assert out_f32.shape == (batch, z_dim)
    assert jnp.allclose(out_f32, ref, atol=3e-5, rtol=3e-5), \
        float(jnp.max(jnp.abs(out_f32 - ref)))

    # Default fast path (bf16 weights on the MXU, f32 accumulation).
    prepared = prepare_params(params)          # hoisted: pad/cast weights once
    out_bf16 = jax.block_until_ready(vector_field(x, prepared))
    assert out_bf16.shape == (batch, z_dim)
    assert jnp.allclose(out_bf16, ref, atol=1e-1, rtol=1e-1), \
        float(jnp.max(jnp.abs(out_bf16 - ref)))

    print("KERNEL_OK")
</pallas_src>

<mosaic_0001>
module attributes {stable_mosaic.version = 11 : i64} {
  func.func @vector_field_kernel(%arg0: i32, %arg1: i32, %arg2: memref<8x8xf32, #tpu.memory_space<vmem>>, %arg3: memref<8x128xf32, #tpu.memory_space<vmem>>, %arg4: memref<1x128xf32, #tpu.memory_space<vmem>>, %arg5: memref<1x128x128xf32, #tpu.memory_space<vmem>>, %arg6: memref<1x1x128xf32, #tpu.memory_space<vmem>>, %arg7: memref<128x128xf32, #tpu.memory_space<vmem>>, %arg8: memref<1x128xf32, #tpu.memory_space<vmem>>, %arg9: memref<8x128xf32, #tpu.memory_space<vmem>>, %arg10: memref<8x128xf32, #tpu.memory_space<vmem>>) attributes {dimension_semantics = [#tpu.dimension_semantics<parallel>, #tpu.dimension_semantics<arbitrary>], iteration_bounds = array<i64: 2, 4>, scalar_prefetch = 0 : i64, scratch_operands = 1 : i64, tpu.core_type = #tpu.core_type<tc>, window_params = [{transform_indices = @transform_0, window_bounds = array<i64: 8, 8>}, {pipeline_mode = #tpu.pipeline_mode<synchronous>, transform_indices = @transform_1, window_bounds = array<i64: 8, 128>}, {pipeline_mode = #tpu.pipeline_mode<synchronous>, transform_indices = @transform_2, window_bounds = array<i64: 1, 128>}, {transform_indices = @transform_3, window_bounds = array<i64: 1, 128, 128>}, {transform_indices = @transform_4, window_bounds = array<i64: 1, 1, 128>}, {pipeline_mode = #tpu.pipeline_mode<synchronous>, transform_indices = @transform_5, window_bounds = array<i64: 128, 128>}, {pipeline_mode = #tpu.pipeline_mode<synchronous>, transform_indices = @transform_6, window_bounds = array<i64: 1, 128>}, {transform_indices = @transform_7, window_bounds = array<i64: 8, 128>}]} {
    %0 = tpu.iota {dimensions = array<i32: 1>} : vector<1x128xi32>
    %c32_i32 = arith.constant 32 : i32
    %1 = vector.broadcast %c32_i32 : i32 to vector<1x128xi32>
    %2 = arith.cmpi slt, %0, %1 : vector<1x128xi32>
    %3 = arith.extui %2 : vector<1x128xi1> to vector<1x128xi32>
    %4 = arith.sitofp %3 : vector<1x128xi32> to vector<1x128xf32>
    %c0_i32 = arith.constant 0 : i32
    %5 = arith.cmpi eq, %arg1, %c0_i32 : i32
    %6 = arith.extui %5 : i1 to i32
    %c0_i32_0 = arith.constant 0 : i32
    %7 = arith.cmpi ne, %6, %c0_i32_0 : i32
    scf.if %7 {
      %c0 = arith.constant 0 : index
      %c0_5 = arith.constant 0 : index
      %16 = vector.load %arg2[%c0, %c0_5] : memref<8x8xf32, #tpu.memory_space<vmem>>, vector<8x8xf32>
      %c0_6 = arith.constant 0 : index
      %c0_7 = arith.constant 0 : index
      %17 = vector.load %arg3[%c0_6, %c0_7] : memref<8x128xf32, #tpu.memory_space<vmem>>, vector<8x128xf32>
      %cst = arith.constant dense<0.000000e+00> : vector<8x128xf32>
      %18 = tpu.matmul %16, %17, %cst {dimension_numbers = #tpu.dot_dimension_numbers<[1], [0], [0], [1], [0, 0, 1, 1], [], []>} : vector<8x8xf32>, vector<8x128xf32>, vector<8x128xf32> -> vector<8x128xf32>
      %c0_8 = arith.constant 0 : index
      %c0_9 = arith.constant 0 : index
      %19 = vector.load %arg4[%c0_8, %c0_9] : memref<1x128xf32, #tpu.memory_space<vmem>>, vector<1x128xf32>
      %20 = vector.broadcast %19 : vector<1x128xf32> to vector<8x128xf32>
      %21 = arith.addf %18, %20 : vector<8x128xf32>
      %cst_10 = arith.constant dense<0.000000e+00> : vector<8xf32>
      %22 = vector.multi_reduction <add>, %21, %cst_10 [1] : vector<8x128xf32> to vector<8xf32>
      %23 = vector.shape_cast %22 : vector<8xf32> to vector<8x1xf32>
      %cst_11 = arith.constant 3.125000e-02 : f32
      %24 = vector.broadcast %cst_11 : f32 to vector<8x1xf32>
      %25 = arith.mulf %23, %24 : vector<8x1xf32>
      %26 = arith.mulf %21, %21 : vector<8x128xf32>
      %cst_12 = arith.constant dense<0.000000e+00> : vector<8xf32>
      %27 = vector.multi_reduction <add>, %26, %cst_12 [1] : vector<8x128xf32> to vector<8xf32>
      %28 = vector.shape_cast %27 : vector<8xf32> to vector<8x1xf32>
      %cst_13 = arith.constant 3.125000e-02 : f32
      %29 = vector.broadcast %cst_13 : f32 to vector<8x1xf32>
      %30 = arith.mulf %28, %29 : vector<8x1xf32>
      %31 = arith.mulf %25, %25 : vector<8x1xf32>
      %32 = arith.subf %30, %31 : vector<8x1xf32>
      %33 = vector.broadcast %25 : vector<8x1xf32> to vector<8x128xf32>
      %34 = arith.subf %21, %33 : vector<8x128xf32>
      %cst_14 = arith.constant 9.99999974E-6 : f32
      %35 = vector.broadcast %cst_14 : f32 to vector<8x1xf32>
      %36 = arith.addf %32, %35 : vector<8x1xf32>
      %37 = math.rsqrt %36 : vector<8x1xf32>
      %38 = vector.broadcast %37 : vector<8x1xf32> to vector<8x128xf32>
      %39 = arith.mulf %34, %38 : vector<8x128xf32>
      %cst_15 = arith.constant 0.000000e+00 : f32
      %40 = vector.broadcast %cst_15 : f32 to vector<8x128xf32>
      %41 = arith.maximumf %39, %40 : vector<8x128xf32>
      %42 = vector.broadcast %4 : vector<1x128xf32> to vector<8x128xf32>
      %43 = arith.mulf %41, %42 : vector<8x128xf32>
      %c0_16 = arith.constant 0 : index
      %c0_17 = arith.constant 0 : index
      %44 = vector.load %arg10[%c0_16, %c0_17] : memref<8x128xf32, #tpu.memory_space<vmem>>, vector<8x128xf32>
      tpu.vector_store %arg10[%c0_16, %c0_17], %43 {strides = array<i32>} : memref<8x128xf32, #tpu.memory_space<vmem>>, vector<8x128xf32>,
    } else {
    }
    %c0_i32_1 = arith.constant 0 : i32
    %8 = arith.cmpi sgt, %arg1, %c0_i32_1 : i32
    %c3_i32 = arith.constant 3 : i32
    %9 = arith.cmpi slt, %arg1, %c3_i32 : i32
    %10 = arith.andi %8, %9 : i1
    %11 = arith.extui %10 : i1 to i32
    %c0_i32_2 = arith.constant 0 : i32
    %12 = arith.cmpi ne, %11, %c0_i32_2 : i32
    scf.if %12 {
      %c0 = arith.constant 0 : index
      %c0_5 = arith.constant 0 : index
      %16 = vector.load %arg10[%c0, %c0_5] : memref<8x128xf32, #tpu.memory_space<vmem>>, vector<8x128xf32>
      %c0_6 = arith.constant 0 : index
      %c0_7 = arith.constant 0 : index
      %c0_8 = arith.constant 0 : index
      %17 = vector.load %arg5[%c0_6, %c0_7, %c0_8] : memref<1x128x128xf32, #tpu.memory_space<vmem>>, vector<1x128x128xf32>
      %18 = vector.shape_cast %17 : vector<1x128x128xf32> to vector<128x128xf32>
      %cst = arith.constant dense<0.000000e+00> : vector<8x128xf32>
      %19 = tpu.matmul %16, %18, %cst {dimension_numbers = #tpu.dot_dimension_numbers<[1], [0], [0], [1], [0, 0, 1, 1], [], []>} : vector<8x128xf32>, vector<128x128xf32>, vector<8x128xf32> -> vector<8x128xf32>
      %c0_9 = arith.constant 0 : index
      %c0_10 = arith.constant 0 : index
      %c0_11 = arith.constant 0 : index
      %20 = vector.load %arg6[%c0_9, %c0_10, %c0_11] : memref<1x1x128xf32, #tpu.memory_space<vmem>>, vector<1x1x128xf32>
      %21 = vector.shape_cast %20 : vector<1x1x128xf32> to vector<1x128xf32>
      %22 = vector.broadcast %21 : vector<1x128xf32> to vector<8x128xf32>
      %23 = arith.addf %19, %22 : vector<8x128xf32>
      %cst_12 = arith.constant dense<0.000000e+00> : vector<8xf32>
      %24 = vector.multi_reduction <add>, %23, %cst_12 [1] : vector<8x128xf32> to vector<8xf32>
      %25 = vector.shape_cast %24 : vector<8xf32> to vector<8x1xf32>
      %cst_13 = arith.constant 3.125000e-02 : f32
      %26 = vector.broadcast %cst_13 : f32 to vector<8x1xf32>
      %27 = arith.mulf %25, %26 : vector<8x1xf32>
      %28 = arith.mulf %23, %23 : vector<8x128xf32>
      %cst_14 = arith.constant dense<0.000000e+00> : vector<8xf32>
      %29 = vector.multi_reduction <add>, %28, %cst_14 [1] : vector<8x128xf32> to vector<8xf32>
      %30 = vector.shape_cast %29 : vector<8xf32> to vector<8x1xf32>
      %cst_15 = arith.constant 3.125000e-02 : f32
      %31 = vector.broadcast %cst_15 : f32 to vector<8x1xf32>
      %32 = arith.mulf %30, %31 : vector<8x1xf32>
      %33 = arith.mulf %27, %27 : vector<8x1xf32>
      %34 = arith.subf %32, %33 : vector<8x1xf32>
      %35 = vector.broadcast %27 : vector<8x1xf32> to vector<8x128xf32>
      %36 = arith.subf %23, %35 : vector<8x128xf32>
      %cst_16 = arith.constant 9.99999974E-6 : f32
      %37 = vector.broadcast %cst_16 : f32 to vector<8x1xf32>
      %38 = arith.addf %34, %37 : vector<8x1xf32>
      %39 = math.rsqrt %38 : vector<8x1xf32>
      %40 = vector.broadcast %39 : vector<8x1xf32> to vector<8x128xf32>
      %41 = arith.mulf %36, %40 : vector<8x128xf32>
      %cst_17 = arith.constant 0.000000e+00 : f32
      %42 = vector.broadcast %cst_17 : f32 to vector<8x128xf32>
      %43 = arith.maximumf %41, %42 : vector<8x128xf32>
      %44 = vector.broadcast %4 : vector<1x128xf32> to vector<8x128xf32>
      %45 = arith.mulf %43, %44 : vector<8x128xf32>
      %c0_18 = arith.constant 0 : index
      %c0_19 = arith.constant 0 : index
      %46 = vector.load %arg10[%c0_18, %c0_19] : memref<8x128xf32, #tpu.memory_space<vmem>>, vector<8x128xf32>
      tpu.vector_store %arg10[%c0_18, %c0_19], %45 {strides = array<i32>} : memref<8x128xf32, #tpu.memory_space<vmem>>, vector<8x128xf32>,
    } else {
    }
    %c3_i32_3 = arith.constant 3 : i32
    %13 = arith.cmpi eq, %arg1, %c3_i32_3 : i32
    %14 = arith.extui %13 : i1 to i32
    %c0_i32_4 = arith.constant 0 : i32
    %15 = arith.cmpi ne, %14, %c0_i32_4 : i32
    scf.if %15 {
      %c0 = arith.constant 0 : index
      %c0_5 = arith.constant 0 : index
      %16 = vector.load %arg10[%c0, %c0_5] : memref<8x128xf32, #tpu.memory_space<vmem>>, vector<8x128xf32>
      %c0_6 = arith.constant 0 : index
      %c0_7 = arith.constant 0 : index
      %17 = vector.load %arg7[%c0_6, %c0_7] : memref<128x128xf32, #tpu.memory_space<vmem>>, vector<128x128xf32>
      %cst = arith.constant dense<0.000000e+00> : vector<8x128xf32>
      %18 = tpu.matmul %16, %17, %cst {dimension_numbers = #tpu.dot_dimension_numbers<[1], [0], [0], [1], [0, 0, 1, 1], [], []>} : vector<8x128xf32>, vector<128x128xf32>, vector<8x128xf32> -> vector<8x128xf32>
      %c0_8 = arith.constant 0 : index
      %c0_9 = arith.constant 0 : index
      %19 = vector.load %arg8[%c0_8, %c0_9] : memref<1x128xf32, #tpu.memory_space<vmem>>, vector<1x128xf32>
      %20 = vector.broadcast %19 : vector<1x128xf32> to vector<8x128xf32>
      %21 = arith.addf %18, %20 : vector<8x128xf32>
      %c0_10 = arith.constant 0 : index
      %c0_11 = arith.constant 0 : index
      %22 = vector.load %arg9[%c0_10, %c0_11] : memref<8x128xf32, #tpu.memory_space<vmem>>, vector<8x128xf32>
      tpu.vector_store %arg9[%c0_10, %c0_11], %21 {strides = array<i32>} : memref<8x128xf32, #tpu.memory_space<vmem>>, vector<8x128xf32>,
    } else {
    }
    return
  }
  func.func @transform_0(%arg0: i32, %arg1: i32) -> (i32, i32) {
    %c0_i32 = arith.constant 0 : i32
    %c0_i32_0 = arith.constant 0 : i32
    return %arg0, %c0_i32 : i32, i32
  }
  func.func @transform_1(%arg0: i32, %arg1: i32) -> (i32, i32) {
    %c0_i32 = arith.constant 0 : i32
    %c0_i32_0 = arith.constant 0 : i32
    %c0_i32_1 = arith.constant 0 : i32
    return %c0_i32, %c0_i32_0 : i32, i32
  }
  func.func @transform_2(%arg0: i32, %arg1: i32) -> (i32, i32) {
    %c0_i32 = arith.constant 0 : i32
    %c0_i32_0 = arith.constant 0 : i32
    %c0_i32_1 = arith.constant 0 : i32
    return %c0_i32, %c0_i32_0 : i32, i32
  }
  func.func @transform_3(%arg0: i32, %arg1: i32) -> (i32, i32, i32) {
    %c1_i32 = arith.constant 1 : i32
    %0 = arith.subi %arg1, %c1_i32 : i32
    %c0_i32 = arith.constant 0 : i32
    %c1_i32_0 = arith.constant 1 : i32
    %1 = arith.maxsi %c0_i32, %0 : i32
    %2 = arith.minsi %c1_i32_0, %1 : i32
    %c0_i32_1 = arith.constant 0 : i32
    %c0_i32_2 = arith.constant 0 : i32
    %c0_i32_3 = arith.constant 0 : i32
    return %2, %c0_i32_1, %c0_i32_2 : i32, i32, i32
  }
  func.func @transform_4(%arg0: i32, %arg1: i32) -> (i32, i32, i32) {
    %c1_i32 = arith.constant 1 : i32
    %0 = arith.subi %arg1, %c1_i32 : i32
    %c0_i32 = arith.constant 0 : i32
    %c1_i32_0 = arith.constant 1 : i32
    %1 = arith.maxsi %c0_i32, %0 : i32
    %2 = arith.minsi %c1_i32_0, %1 : i32
    %c0_i32_1 = arith.constant 0 : i32
    %c0_i32_2 = arith.constant 0 : i32
    %c0_i32_3 = arith.constant 0 : i32
    return %2, %c0_i32_1, %c0_i32_2 : i32, i32, i32
  }
  func.func @transform_5(%arg0: i32, %arg1: i32) -> (i32, i32) {
    %c0_i32 = arith.constant 0 : i32
    %c0_i32_0 = arith.constant 0 : i32
    %c0_i32_1 = arith.constant 0 : i32
    return %c0_i32, %c0_i32_0 : i32, i32
  }
  func.func @transform_6(%arg0: i32, %arg1: i32) -> (i32, i32) {
    %c0_i32 = arith.constant 0 : i32
    %c0_i32_0 = arith.constant 0 : i32
    %c0_i32_1 = arith.constant 0 : i32
    return %c0_i32, %c0_i32_0 : i32, i32
  }
  func.func @transform_7(%arg0: i32, %arg1: i32) -> (i32, i32) {
    %c0_i32 = arith.constant 0 : i32
    %c0_i32_0 = arith.constant 0 : i32
    return %arg0, %c0_i32 : i32, i32
  }
}

</mosaic_0001>

<llo_original>
// kernel: tpu_custom_call.1
$region0: #{tpu_custom_call.1}
  #allocation0 [shape = 'u32[]', space=smem, size = 0x4, offset = 0x4, fixed_abs, tag = 'smem constant byte address 0x4 - core index']
  #allocation1 [shape = 'u32[144,128]{1,0:T(1,128)}', space=vmem, size = 0x12000, scoped, tag = 'internal scratch']
  #allocation2 [shape = 'f32[8,128]{1,0:T(8,128)}', space=vmem, size = 0x1000, scoped, tag = 'scratch operand']
  %s0 = inlined_call_operand.vmem [shape: f32[16,8], index: 0, kind: input, shape index: {}]
  %s1 = inlined_call_operand.vmem [shape: f32[8,128], index: 1, kind: input, shape index: {}]
  %s2 = inlined_call_operand.vmem [shape: f32[1,128], index: 2, kind: input, shape index: {}]
  %s3 = inlined_call_operand.hbm [shape: f32[2,128,128], index: 3, kind: input, shape index: {}]
  %s4 = inlined_call_operand.vmem [shape: f32[2,1,128], index: 4, kind: input, shape index: {}]
  %s5 = inlined_call_operand.hbm [shape: f32[128,128], index: 5, kind: input, shape index: {}]
  %s6 = inlined_call_operand.vmem [shape: f32[1,128], index: 6, kind: input, shape index: {}]
  %s7 = inlined_call_operand.hbm [shape: f32[16,128], index: 7, kind: output, shape index: {}]
  %s8 = sld [smem:[#allocation0]]
  $region81: #{tpu_custom_call.1} parent=0
    _
  %s10 = ssub.s32 1, %s8
  %s11 = scalar_select 0, %s10, %s8
  $region1: #{tpu_custom_call.1} parent=0
    #allocation3 [shape = 'u8[131072]{0}', space=vmem, size = 0x20000, scoped, tag = 'input window, operand 3']
    #allocation4 [shape = 's32[2]{0}', space=sflag, size = 0x8, scoped, tag = 'scoped memory for tpu_custom_call.1']
    #allocation5 [shape = 's32[2]{0}', space=sflag, size = 0x8, scoped, tag = 'scoped memory for tpu_custom_call.1']
    #allocation6 [shape = 'u8[65536]{0}', space=vmem, size = 0x10000, scoped, tag = 'input window, operand 5, single buffered']
    #allocation7 [shape = 's32[1]{0}', space=sflag, size = 0x4, scoped, tag = 'scoped memory for tpu_custom_call.1']
    #allocation8 [shape = 'u8[8192]{0}', space=vmem, size = 0x2000, scoped, tag = 'output window, operand 0']
    %12 = vsyncpa [#allocation4], 0
    %s13 = scalar_lea.sflag [#allocation4], 1
    %14 = vsyncpa %s13, 0
    %15 = vsyncpa [#allocation7], 0
    %16 = vsyncpa [#allocation5], 0
    %s17 = scalar_lea.sflag [#allocation5], 1
    %18 = vsyncpa %s17, 0
    loop: start=0, step=1, limit=10
    $region2: #{tpu_custom_call.1} parent=1 // loop_pre_header
      _
    $region3: #{tpu_custom_call.1} parent=1 // loop_header
      %s20 = sphi 0, %s24
      %p21 = scmp.ge.s32.totalorder %s20, 10
      %s27 = sphi 0, %s39
      %s28 = sphi 0, %s35
      %s29 = sphi 0, %s27
      %s30 = sphi 0, %s28
      %s31 = sphi 0, %s29
      %s32 = sphi 0, %s30
      %s42 = sphi 0, %s44
      %s45 = sphi 0, %s42
      %s46 = sphi 0, %s45
      %s62 = sphi 0, %s46
      %s66 = sphi 0, %s66
      %s68 = sphi 0, %s66
      %s69 = sphi 0, %s68
      %s83 = sphi 0, %s69
      %s87 = sphi 0, %s87
      %s89 = sphi 0, %s87
      %s90 = sphi 0, %s89
      %s104 = sphi 0, %s90
      %s120 = sphi 0, %s122
      %s123 = sphi 0, %s120
      %s124 = sphi 0, %s123
      %s140 = sphi 0, %s124
      %s156 = sphi 0, %s158
      %s159 = sphi 0, %s156
      %s160 = sphi 0, %s159
      %s176 = sphi 0, %s160
      %s180 = sphi 0, %s180
      %s182 = sphi 0, %s180
      %s183 = sphi 0, %s182
      %s197 = sphi 0, %s183
      %s201 = sphi 0, %s201
      %s203 = sphi 0, %s201
      %s204 = sphi 0, %s203
      %s218 = sphi 0, %s204
      %s224 = sphi 0, %s226
      %s227 = sphi 0, %s224
      %s228 = sphi 0, %s227
      %s244 = sphi 0, %s228
    $region4: #{tpu_custom_call.1} parent=1 // loop_header_branch
      %23 = sbr.rel (%p21) target = $region8
    $region5: #{tpu_custom_call.1} parent=1 // loop_body
      %s25 = ssub.s32 %s20, 1
      %s26 = ssub.s32 %s20, 2
      %s33 = sadd.s32 1, %s28
      %p34 = scmp.ge.s32.totalorder %s33, 4
      %s35 = scalar_select %p34, 0, %s33
      %s36 = sadd.s32 1, %s27
      %s37 = scalar_select %p34, %s36, %s27
      %p38 = scmp.ge.s32.totalorder %s37, 2
      %s39 = scalar_select %p38, 0, %s37
      %s40 = ssub.s32 %s27, %s39
      %p41 = scmp.eq.s32.totalorder %s40, 0
      %s43 = sadd.s32 %s42, 1
      %s44 = scalar_select %p41, %s42, %s43
      %p47 = pneg %p41
      %p48 = scmp.eq.s32.totalorder %s20, 7
      %p49 = por %p47, %p48
      %p50 = scmp.ne.s32.totalorder %s42, %s45
      %p51 = scmp.eq.s32.totalorder %s20, 0
      %p52 = por %p50, %p51
      %p53 = scmp.ne.s32.totalorder %s42, %s45
      %p54 = scmp.eq.s32.totalorder %s25, 7
      %p55 = por %p53, %p54
      %p56 = scmp.ne.s32.totalorder %s45, %s46
      %p57 = scmp.eq.s32.totalorder %s25, 0
      %p58 = por %p56, %p57
      %p59 = scmp.ne.s32.totalorder %s45, %s46
      %p60 = scmp.eq.s32.totalorder %s26, 7
      %p61 = por %p59, %p60
      %p63 = scmp.ne.s32.totalorder %s46, %s62
      %p64 = scmp.eq.s32.totalorder %s26, 0
      %p65 = por %p63, %p64
      %s67 = sadd.s32 %s66, 1
      %p70 = scmp.eq.s32.totalorder %s20, 7
      %p71 = scmp.ne.s32.totalorder %s66, %s68
      %p72 = scmp.eq.s32.totalorder %s20, 0
      %p73 = por %p71, %p72
      %p74 = scmp.ne.s32.totalorder %s66, %s68
      %p75 = scmp.eq.s32.totalorder %s25, 7
      %p76 = por %p74, %p75
      %p77 = scmp.ne.s32.totalorder %s68, %s69
      %p78 = scmp.eq.s32.totalorder %s25, 0
      %p79 = por %p77, %p78
      %p80 = scmp.ne.s32.totalorder %s68, %s69
      %p81 = scmp.eq.s32.totalorder %s26, 7
      %p82 = por %p80, %p81
      %p84 = scmp.ne.s32.totalorder %s69, %s83
      %p85 = scmp.eq.s32.totalorder %s26, 0
      %p86 = por %p84, %p85
      %s88 = sadd.s32 %s87, 1
      %p91 = scmp.eq.s32.totalorder %s20, 7
      %p92 = scmp.ne.s32.totalorder %s87, %s89
      %p93 = scmp.eq.s32.totalorder %s20, 0
      %p94 = por %p92, %p93
      %p95 = scmp.ne.s32.totalorder %s87, %s89
      %p96 = scmp.eq.s32.totalorder %s25, 7
      %p97 = por %p95, %p96
      %p98 = scmp.ne.s32.totalorder %s89, %s90
      %p99 = scmp.eq.s32.totalorder %s25, 0
      %p100 = por %p98, %p99
      %p101 = scmp.ne.s32.totalorder %s89, %s90
      %p102 = scmp.eq.s32.totalorder %s26, 7
      %p103 = por %p101, %p102
      %p105 = scmp.ne.s32.totalorder %s90, %s104
      %p106 = scmp.eq.s32.totalorder %s26, 0
      %p107 = por %p105, %p106
      %s108 = ssub.s32 %s28, 1
      %p109 = scmp.gt.s32.totalorder %s108, 0
      %s110 = scalar_select %p109, %s108, 0
      %p111 = scmp.lt.s32.totalorder %s110, 1
      %s112 = scalar_select %p111, %s110, 1
      %s113 = ssub.s32 %s35, 1
      %p114 = scmp.gt.s32.totalorder %s113, 0
      %s115 = scalar_select %p114, %s113, 0
      %p116 = scmp.lt.s32.totalorder %s115, 1
      %s117 = scalar_select %p116, %s115, 1
      %s118 = ssub.s32 %s112, %s117
      %p119 = scmp.eq.s32.totalorder %s118, 0
      %s121 = sadd.s32 %s120, 1
      %s122 = scalar_select %p119, %s120, %s121
      %p125 = pneg %p119
      %p126 = scmp.eq.s32.totalorder %s20, 7
      %p127 = por %p125, %p126
      %p128 = scmp.ne.s32.totalorder %s120, %s123
      %p129 = scmp.eq.s32.totalorder %s20, 0
      %p130 = por %p128, %p129
      %p131 = scmp.ne.s32.totalorder %s120, %s123
      %p132 = scmp.eq.s32.totalorder %s25, 7
      %p133 = por %p131, %p132
      %p134 = scmp.ne.s32.totalorder %s123, %s124
      %p135 = scmp.eq.s32.totalorder %s25, 0
      %p136 = por %p134, %p135
      %p137 = scmp.ne.s32.totalorder %s123, %s124
      %p138 = scmp.eq.s32.totalorder %s26, 7
      %p139 = por %p137, %p138
      %p141 = scmp.ne.s32.totalorder %s124, %s140
      %p142 = scmp.eq.s32.totalorder %s26, 0
      %p143 = por %p141, %p142
      %s144 = ssub.s32 %s28, 1
      %p145 = scmp.gt.s32.totalorder %s144, 0
      %s146 = scalar_select %p145, %s144, 0
      %p147 = scmp.lt.s32.totalorder %s146, 1
      %s148 = scalar_select %p147, %s146, 1
      %s149 = ssub.s32 %s35, 1
      %p150 = scmp.gt.s32.totalorder %s149, 0
      %s151 = scalar_select %p150, %s149, 0
      %p152 = scmp.lt.s32.totalorder %s151, 1
      %s153 = scalar_select %p152, %s151, 1
      %s154 = ssub.s32 %s148, %s153
      %p155 = scmp.eq.s32.totalorder %s154, 0
      %s157 = sadd.s32 %s156, 1
      %s158 = scalar_select %p155, %s156, %s157
      %p161 = pneg %p155
      %p162 = scmp.eq.s32.totalorder %s20, 7
      %p163 = por %p161, %p162
      %p164 = scmp.ne.s32.totalorder %s156, %s159
      %p165 = scmp.eq.s32.totalorder %s20, 0
      %p166 = por %p164, %p165
      %p167 = scmp.ne.s32.totalorder %s156, %s159
      %p168 = scmp.eq.s32.totalorder %s25, 7
      %p169 = por %p167, %p168
      %p170 = scmp.ne.s32.totalorder %s159, %s160
      %p171 = scmp.eq.s32.totalorder %s25, 0
      %p172 = por %p170, %p171
      %p173 = scmp.ne.s32.totalorder %s159, %s160
      %p174 = scmp.eq.s32.totalorder %s26, 7
      %p175 = por %p173, %p174
      %p177 = scmp.ne.s32.totalorder %s160, %s176
      %p178 = scmp.eq.s32.totalorder %s26, 0
      %p179 = por %p177, %p178
      %s181 = sadd.s32 %s180, 1
      %p184 = scmp.eq.s32.totalorder %s20, 7
      %p185 = scmp.ne.s32.totalorder %s180, %s182
      %p186 = scmp.eq.s32.totalorder %s20, 0
      %p187 = por %p185, %p186
      %p188 = scmp.ne.s32.totalorder %s180, %s182
      %p189 = scmp.eq.s32.totalorder %s25, 7
      %p190 = por %p188, %p189
      %p191 = scmp.ne.s32.totalorder %s182, %s183
      %p192 = scmp.eq.s32.totalorder %s25, 0
      %p193 = por %p191, %p192
      %p194 = scmp.ne.s32.totalorder %s182, %s183
      %p195 = scmp.eq.s32.totalorder %s26, 7
      %p196 = por %p194, %p195
      %p198 = scmp.ne.s32.totalorder %s183, %s197
      %p199 = scmp.eq.s32.totalorder %s26, 0
      %p200 = por %p198, %p199
      %s202 = sadd.s32 %s201, 1
      %p205 = scmp.eq.s32.totalorder %s20, 7
      %p206 = scmp.ne.s32.totalorder %s201, %s203
      %p207 = scmp.eq.s32.totalorder %s20, 0
      %p208 = por %p206, %p207
      %p209 = scmp.ne.s32.totalorder %s201, %s203
      %p210 = scmp.eq.s32.totalorder %s25, 7
      %p211 = por %p209, %p210
      %p212 = scmp.ne.s32.totalorder %s203, %s204
      %p213 = scmp.eq.s32.totalorder %s25, 0
      %p214 = por %p212, %p213
      %p215 = scmp.ne.s32.totalorder %s203, %s204
      %p216 = scmp.eq.s32.totalorder %s26, 7
      %p217 = por %p215, %p216
      %p219 = scmp.ne.s32.totalorder %s204, %s218
      %p220 = scmp.eq.s32.totalorder %s26, 0
      %p221 = por %p219, %p220
      %s222 = ssub.s32 %s27, %s39
      %p223 = scmp.eq.s32.totalorder %s222, 0
      %s225 = sadd.s32 %s224, 1
      %s226 = scalar_select %p223, %s224, %s225
      %p229 = pneg %p223
      %p230 = scmp.eq.s32.totalorder %s20, 7
      %p231 = por %p229, %p230
      %p232 = scmp.ne.s32.totalorder %s224, %s227
      %p233 = scmp.eq.s32.totalorder %s20, 0
      %p234 = por %p232, %p233
      %p235 = scmp.ne.s32.totalorder %s224, %s227
      %p236 = scmp.eq.s32.totalorder %s25, 7
      %p237 = por %p235, %p236
      %p238 = scmp.ne.s32.totalorder %s227, %s228
      %p239 = scmp.eq.s32.totalorder %s25, 0
      %p240 = por %p238, %p239
      %p241 = scmp.ne.s32.totalorder %s227, %s228
      %p242 = scmp.eq.s32.totalorder %s26, 7
      %p243 = por %p241, %p242
      %p245 = scmp.ne.s32.totalorder %s228, %s244
      %p246 = scmp.eq.s32.totalorder %s26, 0
      %p247 = por %p245, %p246
      %p248 = scmp.le.s32.totalorder 1, %s20
      %p249 = scmp.lt.s32.totalorder %s20, 9
      %p250 = pnand %p248, %p249
      %p251 = pneg %p250
      // Predicated region
      $region9: #{tpu_custom_call.1} parent=5 // pred_check
        _
      $region10: #{tpu_custom_call.1} parent=5 // pred_check_branch
        %253 = sbr.rel (%p250) target = $region12
      $region11: #{tpu_custom_call.1} parent=5 // pred_region
        %s254 = ssub.s32 %s20, 1
        // Predicated region
        $region13: #{tpu_custom_call.1} parent=11 // pred_check
          %p255 = pneg %p79
        $region14: #{tpu_custom_call.1} parent=11 // pred_check_branch
          %257 = sbr.rel (%p255) target = $region16
        $region15: #{tpu_custom_call.1} parent=11 // pred_region
          _
        $region16: #{tpu_custom_call.1} parent=11 // pred_fallthru
          _
        // Predicated region
        $region17: #{tpu_custom_call.1} parent=11 // pred_check
          %p258 = pneg %p100
        $region18: #{tpu_custom_call.1} parent=11 // pred_check_branch
          %260 = sbr.rel (%p258) target = $region20
        $region19: #{tpu_custom_call.1} parent=11 // pred_region
          _
        $region20: #{tpu_custom_call.1} parent=11 // pred_fallthru
          _
        // Predicated region
        $region21: #{tpu_custom_call.1} parent=11 // pred_check
          %p261 = pneg %p193
        $region22: #{tpu_custom_call.1} parent=11 // pred_check_branch
          %263 = sbr.rel (%p261) target = $region24
        $region23: #{tpu_custom_call.1} parent=11 // pred_region
          %s265 = ssub.s32 2048, 2048
          %266 = vsyncadd [#allocation7], %s265
          %s267 = sshll.u32 [#allocation6], 4
          %s268 = int_to_ptr.vmem [resolvable:$true] %s267
          %273 = dma.hbm_to_vmem [thread:$0]  %s5, 2048, %s268, [#allocation7], 128, 128, 8
        $region24: #{tpu_custom_call.1} parent=11 // pred_fallthru
          _
        // Predicated region
        $region25: #{tpu_custom_call.1} parent=11 // pred_check
          %p274 = pneg %p214
        $region26: #{tpu_custom_call.1} parent=11 // pred_check_branch
          %276 = sbr.rel (%p274) target = $region28
        $region27: #{tpu_custom_call.1} parent=11 // pred_region
          _
        $region28: #{tpu_custom_call.1} parent=11 // pred_fallthru
          _
      $region12: #{tpu_custom_call.1} parent=5 // pred_fallthru
        _
      %p277 = scmp.lt.s32.totalorder %s20, 8
      // Predicated region
      $region29: #{tpu_custom_call.1} parent=5 // pred_check
        %p278 = pneg %p277
      $region30: #{tpu_custom_call.1} parent=5 // pred_check_branch
        %280 = sbr.rel (%p278) target = $region32
      $region31: #{tpu_custom_call.1} parent=5 // pred_region
        // Predicated region
        $region33: #{tpu_custom_call.1} parent=31 // pred_check
          %p281 = pneg %p52
        $region34: #{tpu_custom_call.1} parent=31 // pred_check_branch
          %283 = sbr.rel (%p281) target = $region36
        $region35: #{tpu_custom_call.1} parent=31 // pred_region
          %p284 = scmp.lt.s32.totalorder %s27, 1
          %s285 = scalar_select %p284, %s27, 1
          %s286 = smul.addr %s285, 8
          %s287 = scalar_lea.vmem %s0, %s286
        $region36: #{tpu_custom_call.1} parent=31 // pred_fallthru
          _
        // Predicated region
        $region37: #{tpu_custom_call.1} parent=31 // pred_check
          %p288 = pneg %p130
        $region38: #{tpu_custom_call.1} parent=31 // pred_check_branch
          %290 = sbr.rel (%p288) target = $region40
        $region39: #{tpu_custom_call.1} parent=31 // pred_region
          %s291 = sand.u32 %s120, 1
          %s292 = scalar_lea.sflag [#allocation4], %s291
          %s293 = sand.u32 %s120, 1
          %s294 = smul.addr %s293, 128
          %s295 = scalar_lea.vmem [#allocation3], %s294
          %s296 = ssub.s32 %s28, 1
          %p297 = scmp.gt.s32.totalorder %s296, 0
          %s298 = scalar_select %p297, %s296, 0
          %p299 = scmp.lt.s32.totalorder %s298, 1
          %s300 = scalar_select %p299, %s298, 1
          %s302 = ssub.s32 2048, 2048
          %303 = vsyncadd %s292, %s302
          %s304 = smul.addr %s300, 16
          %s305 = smul.addr %s304, 128
          %s306 = scalar_lea.hbm %s3, %s305
          %s307 = sshll.u32 %s295, 4
          %s308 = int_to_ptr.vmem [resolvable:$true] %s307
          %313 = dma.hbm_to_vmem [thread:$0]  %s306, 2048, %s308, %s292, 128, 128, 8
        $region40: #{tpu_custom_call.1} parent=31 // pred_fallthru
          _
        // Predicated region
        $region41: #{tpu_custom_call.1} parent=31 // pred_check
          %p314 = pneg %p166
        $region42: #{tpu_custom_call.1} parent=31 // pred_check_branch
          %316 = sbr.rel (%p314) target = $region44
        $region43: #{tpu_custom_call.1} parent=31 // pred_region
          %s317 = ssub.s32 %s28, 1
          %p318 = scmp.gt.s32.totalorder %s317, 0
          %s319 = scalar_select %p318, %s317, 0
          %p320 = scmp.lt.s32.totalorder %s319, 1
          %s321 = scalar_select %p320, %s319, 1
          %p322 = scmp.lt.s32.totalorder %s321, 1
          %s323 = scalar_select %p322, %s321, 1
          %s324 = scalar_lea.vmem %s4, %s323
          %s325 = ssub.s32 %s28, 1
          %p326 = scmp.gt.s32.totalorder %s325, 0
          %s327 = scalar_select %p326, %s325, 0
          %p328 = scmp.lt.s32.totalorder %s327, 1
          %s329 = scalar_select %p328, %s327, 1
        $region44: #{tpu_custom_call.1} parent=31 // pred_fallthru
          _
      $region32: #{tpu_custom_call.1} parent=5 // pred_fallthru
        _
      %p330 = scmp.le.s32.totalorder 1, %s20
      %p331 = scmp.lt.s32.totalorder %s20, 9
      %p332 = pnand %p330, %p331
      %p333 = pneg %p332
      // Predicated region
      $region45: #{tpu_custom_call.1} parent=5 // pred_check
        _
      $region46: #{tpu_custom_call.1} parent=5 // pred_check_branch
        %335 = sbr.rel (%p332) target = $region48
      $region47: #{tpu_custom_call.1} parent=5 // pred_region
        %s336 = ssub.s32 %s20, 1
        %s337 = sand.u32 %s123, 1
        %s338 = scalar_lea.sflag [#allocation4], %s337
        %s339 = sand.u32 %s123, 1
        %s340 = smul.addr %s339, 128
        %s341 = scalar_lea.vmem [#allocation3], %s340
        // Predicated region
        $region49: #{tpu_custom_call.1} parent=47 // pred_check
          %p342 = pneg %p136
        $region50: #{tpu_custom_call.1} parent=47 // pred_check_branch
          %344 = sbr.rel (%p342) target = $region52
        $region51: #{tpu_custom_call.1} parent=47 // pred_region
          %345 = dma.done %s338, 2048
        $region52: #{tpu_custom_call.1} parent=47 // pred_fallthru
          _
        // Predicated region
        $region53: #{tpu_custom_call.1} parent=47 // pred_check
          %p346 = pneg %p193
        $region54: #{tpu_custom_call.1} parent=47 // pred_check_branch
          %348 = sbr.rel (%p346) target = $region56
        $region55: #{tpu_custom_call.1} parent=47 // pred_region
          %349 = dma.done [#allocation7], 2048
        $region56: #{tpu_custom_call.1} parent=47 // pred_fallthru
          _
        %p350 = scmp.lt.s32.totalorder %s29, 1
        %s351 = scalar_select %p350, %s29, 1
        %s352 = smul.addr %s351, 8
        %s353 = scalar_lea.vmem %s0, %s352
        %p354 = pneg %p58
        %p355 = pneg %p55
        %p356 = pneg %p79
        %p357 = pneg %p76
        %p358 = pneg %p100
        %p359 = pneg %p97
        %s360 = sand.u32 %s123, 1
        %s361 = scalar_lea.sflag [#allocation4], %s360
        %s362 = sand.u32 %s123, 1
        %s363 = smul.addr %s362, 128
        %s364 = scalar_lea.vmem [#allocation3], %s363
        %p365 = pneg %p136
        %p366 = pneg %p133
        %s367 = ssub.s32 %s30, 1
        %p368 = scmp.gt.s32.totalorder %s367, 0
        %s369 = scalar_select %p368, %s367, 0
        %p370 = scmp.lt.s32.totalorder %s369, 1
        %s371 = scalar_select %p370, %s369, 1
        %p372 = scmp.lt.s32.totalorder %s371, 1
        %s373 = scalar_select %p372, %s371, 1
        %s374 = scalar_lea.vmem %s4, %s373
        %p375 = pneg %p172
        %p376 = pneg %p169
        %p377 = pneg %p193
        %p378 = pneg %p190
        %p379 = pneg %p214
        %p380 = pneg %p211
        %p381 = pneg %p240
        %p382 = pneg %p237
        %s383 = sand.u32 %s227, 1
        %s384 = scalar_lea.sflag [#allocation5], %s383
        %s385 = sand.u32 %s227, 1
        %s386 = smul.addr %s385, 8
        %s387 = scalar_lea.vmem [#allocation8], %s386
        %p388 = scmp.lt.s32.totalorder %s29, 1
        %s389 = scalar_select %p388, %s29, 1
        %s390 = smul.addr %s389, 8
        %s391 = scalar_lea.vmem %s0, %s390
        %s392 = ssub.s32 %s30, 1
        %p393 = scmp.gt.s32.totalorder %s392, 0
        %s394 = scalar_select %p393, %s392, 0
        %p395 = scmp.lt.s32.totalorder %s394, 1
        %s396 = scalar_select %p395, %s394, 1
        %s397 = ssub.s32 %s30, 1
        %p398 = scmp.gt.s32.totalorder %s397, 0
        %s399 = scalar_select %p398, %s397, 0
        %p400 = scmp.lt.s32.totalorder %s399, 1
        %s401 = scalar_select %p400, %s399, 1
        %p402 = scmp.lt.s32.totalorder %s401, 1
        %s403 = scalar_select %p402, %s401, 1
        %s404 = scalar_lea.vmem %s4, %s403
        %s405 = ssub.s32 %s30, 1
        %p406 = scmp.gt.s32.totalorder %s405, 0
        %s407 = scalar_select %p406, %s405, 0
        %p408 = scmp.lt.s32.totalorder %s407, 1
        %s409 = scalar_select %p408, %s407, 1
        %v410 = vlaneseq
        %v411 = vand.u32 %v410, 127
        %vm412 = vcmp.lt.s32.totalorder %v411, 32
        %v413 = vsel %vm412, 1, 0
        %v414 = vcvt.s32.f32 %v413
        %p415 = scmp.eq.s32.totalorder %s30, 0
        // Predicated region
        $region57: #{tpu_custom_call.1} parent=47 // pred_check
          %p416 = pneg %p415
        $region58: #{tpu_custom_call.1} parent=47 // pred_check_branch
          %418 = sbr.rel (%p416) target = $region60
        $region59: #{tpu_custom_call.1} parent=47 // pred_region
          %v419 = vld [vmem:[%s391] sm:$0xff]
          %v420 = vld [vmem:[%s1] sm:$0xff]
          %v421 = vld [vmem:[%s2] sm:$0x1]
          %v423 = vlaneseq
          %v424 = vshrl.u32 %v423, 7
          %v425 = vsub.s32 0, %v424
          %v426 = vrot.slane %v421, %v425
          %vm428 = vcmask 64512
          %v430 = vsel %vm428, %v419, 0
          %432 = vmatprep.subr.mxu0 0.0
          %433 = vmatpush1.msra.mxu0 0.0
          %434 = vmatprep.subr.mxu0 0.0
          %435 = vmatpush1.msra.mxu0 0.0
          %436 = vmatprep.subr.mxu0 0.0
          %437 = vmatpush1.msra.mxu0 0.0
          %438 = vmatprep.subr.mxu0 0.0
          %439 = vmatpush1.msra.mxu0 0.0
          %440 = vmatprep.subr.mxu0 0.0
          %441 = vmatpush1.msra.mxu0 0.0
          %442 = vmatprep.subr.mxu0 0.0
          %443 = vmatpush1.msra.mxu0 0.0
          %444 = vmatprep.subr.mxu0 0.0
          %445 = vmatpush1.msra.mxu0 0.0
          %446 = vmatprep.subr.mxu0 0.0
          %447 = vmatpush1.msra.mxu0 0.0
          %448 = vmatprep.subr.mxu0 0.0
          %449 = vmatpush1.msra.mxu0 0.0
          %450 = vmatprep.subr.mxu0 0.0
          %451 = vmatpush1.msra.mxu0 0.0
          %452 = vmatprep.subr.mxu0 0.0
          %453 = vmatpush1.msra.mxu0 0.0
          %454 = vmatprep.subr.mxu0 0.0
          %455 = vmatpush1.msra.mxu0 0.0
          %456 = vmatprep.subr.mxu0 0.0
          %457 = vmatpush1.msra.mxu0 0.0
          %458 = vmatprep.subr.mxu0 0.0
          %459 = vmatpush1.msra.mxu0 0.0
          %460 = vmatprep.subr.mxu0 0.0
          %461 = vmatpush1.msra.mxu0 0.0
          %462 = vmatprep.subr.mxu0 0.0
          %463 = vmatpush1.msra.mxu0 %v420
          %464 = vmatprep.subr.mxu0 0.0
          %465 = vmatpush2.msra.mxu0 0.0
          %466 = vmatprep.subr.mxu0 0.0
          %467 = vmatpush2.msra.mxu0 0.0
          %468 = vmatprep.subr.mxu0 0.0
          %469 = vmatpush2.msra.mxu0 0.0
          %470 = vmatprep.subr.mxu0 0.0
          %471 = vmatpush2.msra.mxu0 0.0
          %472 = vmatprep.subr.mxu0 0.0
          %473 = vmatpush2.msra.mxu0 0.0
          %474 = vmatprep.subr.mxu0 0.0
          %475 = vmatpush2.msra.mxu0 0.0
          %476 = vmatprep.subr.mxu0 0.0
          %477 = vmatpush2.msra.mxu0 0.0
          %478 = vmatprep.subr.mxu0 0.0
          %479 = vmatpush2.msra.mxu0 0.0
          %480 = vmatprep.subr.mxu0 0.0
          %481 = vmatpush2.msra.mxu0 0.0
          %482 = vmatprep.subr.mxu0 0.0
          %483 = vmatpush2.msra.mxu0 0.0
          %484 = vmatprep.subr.mxu0 0.0
          %485 = vmatpush2.msra.mxu0 0.0
          %486 = vmatprep.subr.mxu0 0.0
          %487 = vmatpush2.msra.mxu0 0.0
          %488 = vmatprep.subr.mxu0 0.0
          %489 = vmatpush2.msra.mxu0 0.0
          %490 = vmatprep.subr.mxu0 0.0
          %491 = vmatpush2.msra.mxu0 0.0
          %492 = vmatprep.subr.mxu0 0.0
          %493 = vmatpush2.msra.mxu0 0.0
          %494 = vmatprep.subr.mxu0 0.0
          %495 = vmatpush2.msra.mxu0 0.0
          %496 = vmatprep.mubr.f32.mxu0 0.0
          %497 = vmatmul.mubr.f32.gmra.mxu0 %v430
          %v498 = vpop.f32.mrf.mxu0
          %v499 = vadd.f32 %v426, %v498
          %v500 = vpop.f32.mrf.mxu0
          %501 = vdwg.mxu0
          %502 = vadd.xlane.f32.xlu0 %v499
          %v503 = vpop.xlane.xlu0 %502
          %v504 = vmul.f32 %v503, 0.03125
          %v505 = vmul.f32 %v499, %v499
          %506 = vadd.xlane.f32.xlu0 %v505
          %v507 = vpop.xlane.xlu0 %506
          %v508 = vmul.f32 %v507, 0.03125
          %v509 = vmul.f32 %v504, %v504
          %v510 = vsub.f32 %v508, %v509
          %v511 = vsub.f32 %v499, %v504
          %v512 = vadd.f32 %v510, 1e-05
          %v513 = vrsqrt.pop %v512
          %v514 = vmul.f32 %v511, %v513
          %v515 = vmax.f32 %v514, 0.0
          %v516 = vmul.f32 %v515, %v414
          %517 = vst [vmem:[#allocation2] sm:$0xff] %v516
        $region60: #{tpu_custom_call.1} parent=47 // pred_fallthru
          _
        %p518 = scmp.gt.s32.totalorder %s30, 0
        %p519 = scmp.lt.s32.totalorder %s30, 3
        %p520 = pnand %p518, %p519
        %p521 = pneg %p520
        // Predicated region
        $region61: #{tpu_custom_call.1} parent=47 // pred_check
          _
        $region62: #{tpu_custom_call.1} parent=47 // pred_check_branch
          %523 = sbr.rel (%p520) target = $region64
        $region63: #{tpu_custom_call.1} parent=47 // pred_region
          %v524 = vld [vmem:[#allocation2] sm:$0xff]
          %v525 = vld [vmem:[%s341] sm:$0xff]
          %v526 = vld [vmem:[%s341 + $0x8] sm:$0xff]
          %v527 = vld [vmem:[%s341 + $0x10] sm:$0xff]
          %v528 = vld [vmem:[%s341 + $0x18] sm:$0xff]
          %v529 = vld [vmem:[%s341 + $0x20] sm:$0xff]
          %v530 = vld [vmem:[%s341 + $0x28] sm:$0xff]
          %v531 = vld [vmem:[%s341 + $0x30] sm:$0xff]
          %v532 = vld [vmem:[%s341 + $0x38] sm:$0xff]
          %v533 = vld [vmem:[%s341 + $0x40] sm:$0xff]
          %v534 = vld [vmem:[%s341 + $0x48] sm:$0xff]
          %v535 = vld [vmem:[%s341 + $0x50] sm:$0xff]
          %v536 = vld [vmem:[%s341 + $0x58] sm:$0xff]
          %v537 = vld [vmem:[%s341 + $0x60] sm:$0xff]
          %v538 = vld [vmem:[%s341 + $0x68] sm:$0xff]
          %v539 = vld [vmem:[%s341 + $0x70] sm:$0xff]
          %v540 = vld [vmem:[%s341 + $0x78] sm:$0xff]
          %v541 = vld [vmem:[%s404] sm:$0x1]
          %v543 = vlaneseq
          %v544 = vshrl.u32 %v543, 7
          %v545 = vsub.s32 0, %v544
          %v546 = vrot.slane %v541, %v545
          %548 = vmatprep.subr.mxu0 0.0
          %549 = vmatpush1.msra.mxu0 %v540
          %550 = vmatprep.subr.mxu0 0.0
          %551 = vmatpush1.msra.mxu0 %v539
          %552 = vmatprep.subr.mxu0 0.0
          %553 = vmatpush1.msra.mxu0 %v538
          %554 = vmatprep.subr.mxu0 0.0
          %555 = vmatpush1.msra.mxu0 %v537
          %556 = vmatprep.subr.mxu0 0.0
          %557 = vmatpush1.msra.mxu0 %v536
          %558 = vmatprep.subr.mxu0 0.0
          %559 = vmatpush1.msra.mxu0 %v535
          %560 = vmatprep.subr.mxu0 0.0
          %561 = vmatpush1.msra.mxu0 %v534
          %562 = vmatprep.subr.mxu0 0.0
          %563 = vmatpush1.msra.mxu0 %v533
          %564 = vmatprep.subr.mxu0 0.0
          %565 = vmatpush1.msra.mxu0 %v532
          %566 = vmatprep.subr.mxu0 0.0
          %567 = vmatpush1.msra.mxu0 %v531
          %568 = vmatprep.subr.mxu0 0.0
          %569 = vmatpush1.msra.mxu0 %v530
          %570 = vmatprep.subr.mxu0 0.0
          %571 = vmatpush1.msra.mxu0 %v529
          %572 = vmatprep.subr.mxu0 0.0
          %573 = vmatpush1.msra.mxu0 %v528
          %574 = vmatprep.subr.mxu0 0.0
          %575 = vmatpush1.msra.mxu0 %v527
          %576 = vmatprep.subr.mxu0 0.0
          %577 = vmatpush1.msra.mxu0 %v526
          %578 = vmatprep.subr.mxu0 0.0
          %579 = vmatpush1.msra.mxu0 %v525
          %580 = vmatprep.subr.mxu0 0.0
          %581 = vmatpush2.msra.mxu0 0.0
          %582 = vmatprep.subr.mxu0 0.0
          %583 = vmatpush2.msra.mxu0 0.0
          %584 = vmatprep.subr.mxu0 0.0
          %585 = vmatpush2.msra.mxu0 0.0
          %586 = vmatprep.subr.mxu0 0.0
          %587 = vmatpush2.msra.mxu0 0.0
          %588 = vmatprep.subr.mxu0 0.0
          %589 = vmatpush2.msra.mxu0 0.0
          %590 = vmatprep.subr.mxu0 0.0
          %591 = vmatpush2.msra.mxu0 0.0
          %592 = vmatprep.subr.mxu0 0.0
          %593 = vmatpush2.msra.mxu0 0.0
          %594 = vmatprep.subr.mxu0 0.0
          %595 = vmatpush2.msra.mxu0 0.0
          %596 = vmatprep.subr.mxu0 0.0
          %597 = vmatpush2.msra.mxu0 0.0
          %598 = vmatprep.subr.mxu0 0.0
          %599 = vmatpush2.msra.mxu0 0.0
          %600 = vmatprep.subr.mxu0 0.0
          %601 = vmatpush2.msra.mxu0 0.0
          %602 = vmatprep.subr.mxu0 0.0
          %603 = vmatpush2.msra.mxu0 0.0
          %604 = vmatprep.subr.mxu0 0.0
          %605 = vmatpush2.msra.mxu0 0.0
          %606 = vmatprep.subr.mxu0 0.0
          %607 = vmatpush2.msra.mxu0 0.0
          %608 = vmatprep.subr.mxu0 0.0
          %609 = vmatpush2.msra.mxu0 0.0
          %610 = vmatprep.subr.mxu0 0.0
          %611 = vmatpush2.msra.mxu0 0.0
          %612 = vmatprep.mubr.f32.mxu0 0.0
          %613 = vmatmul.mubr.f32.gmra.mxu0 %v524
          %v614 = vpop.f32.mrf.mxu0
          %v615 = vadd.f32 %v546, %v614
          %v616 = vpop.f32.mrf.mxu0
          %617 = vdwg.mxu0
          %618 = vadd.xlane.f32.xlu0 %v615
          %v619 = vpop.xlane.xlu0 %618
          %v620 = vmul.f32 %v619, 0.03125
          %v621 = vmul.f32 %v615, %v615
          %622 = vadd.xlane.f32.xlu0 %v621
          %v623 = vpop.xlane.xlu0 %622
          %v624 = vmul.f32 %v623, 0.03125
          %v625 = vmul.f32 %v620, %v620
          %v626 = vsub.f32 %v624, %v625
          %v627 = vsub.f32 %v615, %v620
          %v628 = vadd.f32 %v626, 1e-05
          %v629 = vrsqrt.pop %v628
          %v630 = vmul.f32 %v627, %v629
          %v631 = vmax.f32 %v630, 0.0
          %v632 = vmul.f32 %v631, %v414
          %633 = vst [vmem:[#allocation2] sm:$0xff] %v632
        $region64: #{tpu_custom_call.1} parent=47 // pred_fallthru
          _
        %p634 = scmp.eq.s32.totalorder %s30, 3
        // Predicated region
        $region65: #{tpu_custom_call.1} parent=47 // pred_check
          %p635 = pneg %p634
        $region66: #{tpu_custom_call.1} parent=47 // pred_check_branch
          %637 = sbr.rel (%p635) target = $region68
        $region67: #{tpu_custom_call.1} parent=47 // pred_region
          %v638 = vld [vmem:[#allocation2] sm:$0xff]
          %v639 = vld [vmem:[#allocation6] sm:$0xff]
          %v640 = vld [vmem:[#allocation6 + $0x8] sm:$0xff]
          %v641 = vld [vmem:[#allocation6 + $0x10] sm:$0xff]
          %v642 = vld [vmem:[#allocation6 + $0x18] sm:$0xff]
          %v643 = vld [vmem:[#allocation6 + $0x20] sm:$0xff]
          %v644 = vld [vmem:[#allocation6 + $0x28] sm:$0xff]
          %v645 = vld [vmem:[#allocation6 + $0x30] sm:$0xff]
          %v646 = vld [vmem:[#allocation6 + $0x38] sm:$0xff]
          %v647 = vld [vmem:[#allocation6 + $0x40] sm:$0xff]
          %v648 = vld [vmem:[#allocation6 + $0x48] sm:$0xff]
          %v649 = vld [vmem:[#allocation6 + $0x50] sm:$0xff]
          %v650 = vld [vmem:[#allocation6 + $0x58] sm:$0xff]
          %v651 = vld [vmem:[#allocation6 + $0x60] sm:$0xff]
          %v652 = vld [vmem:[#allocation6 + $0x68] sm:$0xff]
          %v653 = vld [vmem:[#allocation6 + $0x70] sm:$0xff]
          %v654 = vld [vmem:[#allocation6 + $0x78] sm:$0xff]
          %v655 = vld [vmem:[%s6] sm:$0x1]
          %v657 = vlaneseq
          %v658 = vshrl.u32 %v657, 7
          %v659 = vsub.s32 0, %v658
          %v660 = vrot.slane %v655, %v659
          %662 = vmatprep.subr.mxu0 0.0
          %663 = vmatpush1.msra.mxu0 %v654
          %664 = vmatprep.subr.mxu0 0.0
          %665 = vmatpush1.msra.mxu0 %v653
          %666 = vmatprep.subr.mxu0 0.0
          %667 = vmatpush1.msra.mxu0 %v652
          %668 = vmatprep.subr.mxu0 0.0
          %669 = vmatpush1.msra.mxu0 %v651
          %670 = vmatprep.subr.mxu0 0.0
          %671 = vmatpush1.msra.mxu0 %v650
          %672 = vmatprep.subr.mxu0 0.0
          %673 = vmatpush1.msra.mxu0 %v649
          %674 = vmatprep.subr.mxu0 0.0
          %675 = vmatpush1.msra.mxu0 %v648
          %676 = vmatprep.subr.mxu0 0.0
          %677 = vmatpush1.msra.mxu0 %v647
          %678 = vmatprep.subr.mxu0 0.0
          %679 = vmatpush1.msra.mxu0 %v646
          %680 = vmatprep.subr.mxu0 0.0
          %681 = vmatpush1.msra.mxu0 %v645
          %682 = vmatprep.subr.mxu0 0.0
          %683 = vmatpush1.msra.mxu0 %v644
          %684 = vmatprep.subr.mxu0 0.0
          %685 = vmatpush1.msra.mxu0 %v643
          %686 = vmatprep.subr.mxu0 0.0
          %687 = vmatpush1.msra.mxu0 %v642
          %688 = vmatprep.subr.mxu0 0.0
          %689 = vmatpush1.msra.mxu0 %v641
          %690 = vmatprep.subr.mxu0 0.0
          %691 = vmatpush1.msra.mxu0 %v640
          %692 = vmatprep.subr.mxu0 0.0
          %693 = vmatpush1.msra.mxu0 %v639
          %694 = vmatprep.subr.mxu0 0.0
          %695 = vmatpush2.msra.mxu0 0.0
          %696 = vmatprep.subr.mxu0 0.0
          %697 = vmatpush2.msra.mxu0 0.0
          %698 = vmatprep.subr.mxu0 0.0
          %699 = vmatpush2.msra.mxu0 0.0
          %700 = vmatprep.subr.mxu0 0.0
          %701 = vmatpush2.msra.mxu0 0.0
          %702 = vmatprep.subr.mxu0 0.0
          %703 = vmatpush2.msra.mxu0 0.0
          %704 = vmatprep.subr.mxu0 0.0
          %705 = vmatpush2.msra.mxu0 0.0
          %706 = vmatprep.subr.mxu0 0.0
          %707 = vmatpush2.msra.mxu0 0.0
          %708 = vmatprep.subr.mxu0 0.0
          %709 = vmatpush2.msra.mxu0 0.0
          %710 = vmatprep.subr.mxu0 0.0
          %711 = vmatpush2.msra.mxu0 0.0
          %712 = vmatprep.subr.mxu0 0.0
          %713 = vmatpush2.msra.mxu0 0.0
          %714 = vmatprep.subr.mxu0 0.0
          %715 = vmatpush2.msra.mxu0 0.0
          %716 = vmatprep.subr.mxu0 0.0
          %717 = vmatpush2.msra.mxu0 0.0
          %718 = vmatprep.subr.mxu0 0.0
          %719 = vmatpush2.msra.mxu0 0.0
          %720 = vmatprep.subr.mxu0 0.0
          %721 = vmatpush2.msra.mxu0 0.0
          %722 = vmatprep.subr.mxu0 0.0
          %723 = vmatpush2.msra.mxu0 0.0
          %724 = vmatprep.subr.mxu0 0.0
          %725 = vmatpush2.msra.mxu0 0.0
          %726 = vmatprep.mubr.f32.mxu0 0.0
          %727 = vmatmul.mubr.f32.gmra.mxu0 %v638
          %v728 = vpop.f32.mrf.mxu0
          %v729 = vadd.f32 %v660, %v728
          %v730 = vpop.f32.mrf.mxu0
          %731 = vdwg.mxu0
          %732 = vst [vmem:[%s387] sm:$0xff] %v729
        $region68: #{tpu_custom_call.1} parent=47 // pred_fallthru
          _
        %s733 = sand.u32 %s227, 1
        %s734 = scalar_lea.sflag [#allocation5], %s733
        %s735 = sand.u32 %s227, 1
        %s736 = smul.addr %s735, 8
        %s737 = scalar_lea.vmem [#allocation8], %s736
        // Predicated region
        $region69: #{tpu_custom_call.1} parent=47 // pred_check
          %p738 = pneg %p237
        $region70: #{tpu_custom_call.1} parent=47 // pred_check_branch
          %740 = sbr.rel (%p738) target = $region72
        $region71: #{tpu_custom_call.1} parent=47 // pred_region
          %s742 = ssub.s32 128, 128
          %743 = vsyncadd %s734, %s742
          %s744 = smul.addr %s29, 128
          %s745 = scalar_lea.hbm %s7, %s744
          %s747 = sshll.u32 %s737, 4
          %s748 = int_to_ptr.vmem [resolvable:$true] %s747
          %750 = dma.vmem_to_hbm [thread:$0]  %s748, 128, %s745, %s734
        $region72: #{tpu_custom_call.1} parent=47 // pred_fallthru
          _
      $region48: #{tpu_custom_call.1} parent=5 // pred_fallthru
        _
      %p751 = scmp.le.s32.totalorder 2, %s20
      // Predicated region
      $region73: #{tpu_custom_call.1} parent=5 // pred_check
        %p752 = pneg %p751
      $region74: #{tpu_custom_call.1} parent=5 // pred_check_branch
        %754 = sbr.rel (%p752) target = $region76
      $region75: #{tpu_custom_call.1} parent=5 // pred_region
        %s755 = ssub.s32 %s20, 2
        // Predicated region
        $region77: #{tpu_custom_call.1} parent=75 // pred_check
          %p756 = pneg %p243
        $region78: #{tpu_custom_call.1} parent=75 // pred_check_branch
          %758 = sbr.rel (%p756) target = $region80
        $region79: #{tpu_custom_call.1} parent=75 // pred_region
          %s759 = sand.u32 %s228, 1
          %s760 = scalar_lea.sflag [#allocation5], %s759
          %s761 = sand.u32 %s228, 1
          %s762 = smul.addr %s761, 8
          %s763 = scalar_lea.vmem [#allocation8], %s762
          %764 = dma.done %s760, 128
        $region80: #{tpu_custom_call.1} parent=75 // pred_fallthru
          _
      $region76: #{tpu_custom_call.1} parent=5 // pred_fallthru
        _
    $region6: #{tpu_custom_call.1} parent=1 // loop_footer
      %s24 = sadd.s32 1, %s20
    $region7: #{tpu_custom_call.1} parent=1 // loop_footer_branch
      %19 = sbr.rel target = $region3
    $region8: #{tpu_custom_call.1} parent=1 // loop_exit
      _
    %765 = vsyncpa [#allocation4], 1
    %s766 = scalar_lea.sflag [#allocation4], 1
    %767 = vsyncpa %s766, 1
    %768 = vsyncpa [#allocation7], 1
    %769 = vsyncpa [#allocation5], 1
    %s770 = scalar_lea.sflag [#allocation5], 1
    %771 = vsyncpa %s770, 1

</llo_original>
